<compile_context>
chip_gen: v5e
topology: v5e:2x2
jax: 0.10.0
libtpu: 0.0.40
codegen_flags: <defaults>
</compile_context>

<pallas_src>
import jax
import jax.numpy as jnp
from jax import lax
from jax.experimental import pallas as pl
from jax.experimental.pallas import tpu as pltpu


# ----------------------------------------------------------------------------
# Pallas kernel: full forward pass on VMEM-resident tiles, single grid-less
# invocation.
# ----------------------------------------------------------------------------
def _conv_relu_pool(hp_ref, w_ref, b_ref, b_row):
    """One conv(pad=1, k=3, stride=1) + ReLU + maxpool(2) stage.

    hp_ref : (B, Lout+2, Ci) already zero-padded input (VMEM ref)
    w_ref  : (3*Ci, Co) im2col weight (VMEM ref)
    b_ref  : (4, 128) packed biases; row `b_row`, lanes [0:Co]
    returns: (B, Lout//2, Co) pooled activation (value)
    """
    Lp = hp_ref.shape[1]
    Lout = Lp - 2
    c_out = w_ref.shape[1]
    # im2col: stack the K=3 shifted views along the channel (lane) axis so the
    # whole layer is one MXU contraction with a 3x wider K dim.
    patches = jnp.concatenate(
        [hp_ref[:, k:k + Lout, :] for k in range(3)], axis=-1)      # (B, Lout, 3*Ci)
    y = jnp.einsum('blf,fo->blo', patches, w_ref[...],
                   preferred_element_type=jnp.float32)              # one MXU push / batch
    y = y + b_ref[b_row:b_row + 1, :c_out][:, None, :]
    y = jnp.maximum(y, 0.0)
    b, l, c = y.shape
    # MaxPool1d(kernel=2, stride=2) along the length axis.
    return jnp.max(y.reshape(b, l // 2, 2, c), axis=2)


def _store_padded(scr_ref, pooled):
    """Write pooled activations into the interior of a zeroed padded scratch,
    so the next conv layer reads an already-padded buffer."""
    scr_ref[...] = jnp.zeros_like(scr_ref)                  # pad rows := 0
    scr_ref[:, 1:1 + pooled.shape[1], :] = pooled           # interior := pooled


def cnn1d_kernel(x_ref, w1_ref, w2_ref, w3_ref, wfc_ref, b_ref, out_ref,
                 scr1_ref, scr2_ref):
    p1 = _conv_relu_pool(x_ref, w1_ref, b_ref, 0)       # (B, L/2, C1)
    _store_padded(scr1_ref, p1)
    p2 = _conv_relu_pool(scr1_ref, w2_ref, b_ref, 1)    # (B, L/4, C2)
    _store_padded(scr2_ref, p2)
    p3 = _conv_relu_pool(scr2_ref, w3_ref, b_ref, 2)    # (B, L/8, C3)

    # FC head (out_features = 1): VPU multiply + XLU reductions; avoids a
    # sublane->lane flatten relayout and a degenerate N=1 MXU matmul.
    prod = p3 * wfc_ref[...][None, :, :]                # (B, L3, C3)
    s = jnp.sum(prod, axis=1)                           # (B, C3)   sublane reduce
    s = jnp.sum(s, axis=1, keepdims=True)               # (B, 1)    lane reduce
    out_ref[...] = s + b_ref[3:4, 0:1]                  # fc bias


def cnn1d_forward(x_ncw, params):
    """Run the Pallas kernel.  x_ncw: (B, Cin, L) float32 (PyTorch layout)."""
    w1, b1, w2, b2, w3, b3, wfc, bfc = params
    B, Cin, L = x_ncw.shape
    C1, C2, C3 = w1.shape[0], w2.shape[0], w3.shape[0]

    # Kernel is specialised to the module defaults: kernel_size=3, padding=1,
    # and a length that stays even through all three pools.
    assert w1.shape[2] == 3 and w2.shape[2] == 3 and w3.shape[2] == 3
    assert L % 8 == 0
    L1, L2, L3 = L // 2, L // 4, L // 8
    assert wfc.shape == (1, C3 * L3)

    # ---- boundary layout plumbing (plain JAX glue, fused under jit) ----
    x_blc = jnp.transpose(x_ncw, (0, 2, 1))                    # NCW -> NLC
    x_pad = jnp.pad(x_blc, ((0, 0), (1, 1), (0, 0)))           # pre-pad layer-1 input

    def im2col_w(w):                                           # (Co,Ci,K) -> (K*Ci,Co)
        co, ci, k = w.shape
        return jnp.transpose(w, (2, 1, 0)).reshape(k * ci, co)

    w1m, w2m, w3m = im2col_w(w1), im2col_w(w2), im2col_w(w3)

    # torch flattens the NCW tensor: flat index = c*L3 + l; the kernel sums
    # over h[b, l, c] * wfc_lc[l, c].
    wfc_lc = jnp.transpose(wfc.reshape(C3, L3), (1, 0))        # (L3, C3)

    # Pack all biases (+ fc bias) into one small VMEM operand (fewer DMAs).
    def pad128(v):
        return jnp.pad(v, (0, 128 - v.shape[0]))
    b_pack = jnp.stack([pad128(b1), pad128(b2), pad128(b3), pad128(bfc)])  # (4,128)

    vmem = pl.BlockSpec(memory_space=pltpu.MemorySpace.VMEM)
    # TODO(synk): for large batches, add a grid over B with B_tile*L >= 128 rows,
    # dimension_semantics=("parallel",), and bf16 matmul operands; at B=2 a
    # single grid-less VMEM-resident call is the right structure.
    return pl.pallas_call(
        cnn1d_kernel,
        out_shape=jax.ShapeDtypeStruct((B, 1), jnp.float32),
        in_specs=[vmem] * 6,
        out_specs=vmem,
        scratch_shapes=[
            pltpu.VMEM((B, L1 + 2, C1), jnp.float32),          # padded act, layer 2 in
            pltpu.VMEM((B, L2 + 2, C2), jnp.float32),          # padded act, layer 3 in
        ],
    )(x_pad, w1m, w2m, w3m, wfc_lc, b_pack)


# ----------------------------------------------------------------------------
# Pure-JAX reference in the original PyTorch (NCW) convention.
# ----------------------------------------------------------------------------
def reference_forward(x_ncw, params):
    w1, b1, w2, b2, w3, b3, wfc, bfc = params

    def conv_relu(h, w, b):
        y = lax.conv_general_dilated(
            h, w, window_strides=(1,), padding=[(1, 1)],
            dimension_numbers=('NCH', 'OIH', 'NCH'))
        return jnp.maximum(y + b[None, :, None], 0.0)

    def maxpool2(h):
        B, C, L = h.shape
        return jnp.max(h.reshape(B, C, L // 2, 2), axis=-1)

    h = maxpool2(conv_relu(x_ncw, w1, b1))
    h = maxpool2(conv_relu(h, w2, b2))
    h = maxpool2(conv_relu(h, w3, b3))
    flat = h.reshape(h.shape[0], -1)                           # channel-major, like torch.view
    return flat @ wfc.T + bfc[None, :]


if __name__ == "__main__":
    # Module hyper-parameters (small, consistent with the module's constructor).
    B = 2
    input_channels = 4
    data_1d_len = 16
    kernel_size = (3, 3, 3)
    out_channels = (8, 16, 32)

    # Deterministic synthetic parameters (shapes match nn.Conv1d / nn.Linear).
    key = jax.random.PRNGKey(0)
    keys = jax.random.split(key, 9)
    w1 = 0.1 * jax.random.normal(keys[0], (out_channels[0], input_channels, kernel_size[0]), jnp.float32)
    b1 = 0.1 * jax.random.normal(keys[1], (out_channels[0],), jnp.float32)
    w2 = 0.1 * jax.random.normal(keys[2], (out_channels[1], out_channels[0], kernel_size[1]), jnp.float32)
    b2 = 0.1 * jax.random.normal(keys[3], (out_channels[1],), jnp.float32)
    w3 = 0.1 * jax.random.normal(keys[4], (out_channels[2], out_channels[1], kernel_size[2]), jnp.float32)
    b3 = 0.1 * jax.random.normal(keys[5], (out_channels[2],), jnp.float32)

    # fin_fc_width exactly as _get_fc_input_size computes it.
    length = data_1d_len
    for k in kernel_size:
        length = (length + 2 * 1 - k) // 1 + 1
        length = length // 2
    fin_fc_width = length                                      # 2 for L=16, k=3
    wfc = 0.1 * jax.random.normal(keys[6], (1, out_channels[2] * fin_fc_width), jnp.float32)
    bfc = 0.1 * jax.random.normal(keys[7], (1,), jnp.float32)
    params = (w1, b1, w2, b2, w3, b3, wfc, bfc)

    # Input in PyTorch Conv1d layout (B, C, L).
    x = jax.random.normal(keys[8], (B, input_channels, data_1d_len), jnp.float32)

    fwd = jax.jit(lambda xx: cnn1d_forward(xx, params))
    out = jax.block_until_ready(fwd(x))

    ref = reference_forward(x, params)
    assert out.shape == (B, 1)
    assert jnp.allclose(out, ref, atol=1e-4, rtol=1e-4), (out, ref)

    print("KERNEL_OK")
</pallas_src>

<mosaic_0001>
module attributes {stable_mosaic.version = 11 : i64} {
  func.func @cnn1d_kernel(%arg0: memref<2x18x4xf32, #tpu.memory_space<vmem>>, %arg1: memref<12x8xf32, #tpu.memory_space<vmem>>, %arg2: memref<24x16xf32, #tpu.memory_space<vmem>>, %arg3: memref<48x32xf32, #tpu.memory_space<vmem>>, %arg4: memref<2x32xf32, #tpu.memory_space<vmem>>, %arg5: memref<4x128xf32, #tpu.memory_space<vmem>>, %arg6: memref<2x1xf32, #tpu.memory_space<vmem>>, %arg7: memref<2x10x8xf32, #tpu.memory_space<vmem>>, %arg8: memref<2x6x16xf32, #tpu.memory_space<vmem>>) attributes {dimension_semantics = [], scalar_prefetch = 0 : i64, scratch_operands = 2 : i64, tpu.core_type = #tpu.core_type<tc>} {
    %c0 = arith.constant 0 : index
    %c0_0 = arith.constant 0 : index
    %c0_1 = arith.constant 0 : index
    %0 = vector.load %arg0[%c0, %c0_0, %c0_1] : memref<2x18x4xf32, #tpu.memory_space<vmem>>, vector<2x16x4xf32>
    %c0_2 = arith.constant 0 : index
    %c1 = arith.constant 1 : index
    %c0_3 = arith.constant 0 : index
    %1 = vector.load %arg0[%c0_2, %c1, %c0_3] : memref<2x18x4xf32, #tpu.memory_space<vmem>>, vector<2x16x4xf32>
    %c0_4 = arith.constant 0 : index
    %c2 = arith.constant 2 : index
    %c0_5 = arith.constant 0 : index
    %2 = vector.load %arg0[%c0_4, %c2, %c0_5] : memref<2x18x4xf32, #tpu.memory_space<vmem>>, vector<2x16x4xf32>
    %3 = tpu.concatenate %0, %1, %2 in 2 : vector<2x16x4xf32>, vector<2x16x4xf32>, vector<2x16x4xf32> -> vector<2x16x12xf32>
    %c0_6 = arith.constant 0 : index
    %c0_7 = arith.constant 0 : index
    %4 = vector.load %arg1[%c0_6, %c0_7] : memref<12x8xf32, #tpu.memory_space<vmem>>, vector<12x8xf32>
    "tpu.trace_start"() <{level = 10 : i32, message = "blf,fo->blo"}> : () -> ()
    %cst = arith.constant dense<0.000000e+00> : vector<2x16x8xf32>
    %5 = tpu.matmul %3, %4, %cst {dimension_numbers = #tpu.dot_dimension_numbers<[2], [0], [0, 1], [1], [0, 0, 0, 1, 1, 1], [], []>} : vector<2x16x12xf32>, vector<12x8xf32>, vector<2x16x8xf32> -> vector<2x16x8xf32>
    "tpu.trace_stop"() : () -> ()
    %c0_8 = arith.constant 0 : index
    %c0_9 = arith.constant 0 : index
    %6 = vector.load %arg5[%c0_8, %c0_9] : memref<4x128xf32, #tpu.memory_space<vmem>>, vector<1x8xf32>
    %7 = vector.shape_cast %6 : vector<1x8xf32> to vector<1x1x8xf32>
    %8 = vector.broadcast %7 : vector<1x1x8xf32> to vector<2x16x8xf32>
    %9 = arith.addf %5, %8 : vector<2x16x8xf32>
    %cst_10 = arith.constant 0.000000e+00 : f32
    %10 = vector.broadcast %cst_10 : f32 to vector<2x16x8xf32>
    %11 = arith.maximumf %9, %10 : vector<2x16x8xf32>
    %12 = vector.shape_cast %11 : vector<2x16x8xf32> to vector<2x8x2x8xf32>
    %cst_11 = arith.constant dense<0xFF800000> : vector<2x8x8xf32>
    %13 = vector.multi_reduction <maximumf>, %12, %cst_11 [2] : vector<2x8x2x8xf32> to vector<2x8x8xf32>
    %cst_12 = arith.constant 0.000000e+00 : f32
    %14 = vector.broadcast %cst_12 : f32 to vector<2x10x8xf32>
    %c0_13 = arith.constant 0 : index
    %c0_14 = arith.constant 0 : index
    %c0_15 = arith.constant 0 : index
    %15 = vector.load %arg7[%c0_13, %c0_14, %c0_15] : memref<2x10x8xf32, #tpu.memory_space<vmem>>, vector<2x10x8xf32>
    tpu.vector_store %arg7[%c0_13, %c0_14, %c0_15], %14 {strides = array<i32>} : memref<2x10x8xf32, #tpu.memory_space<vmem>>, vector<2x10x8xf32>,
    %c0_16 = arith.constant 0 : index
    %c1_17 = arith.constant 1 : index
    %c0_18 = arith.constant 0 : index
    %16 = vector.load %arg7[%c0_16, %c1_17, %c0_18] : memref<2x10x8xf32, #tpu.memory_space<vmem>>, vector<2x8x8xf32>
    tpu.vector_store %arg7[%c0_16, %c1_17, %c0_18], %13 {strides = array<i32>} : memref<2x10x8xf32, #tpu.memory_space<vmem>>, vector<2x8x8xf32>,
    %c0_19 = arith.constant 0 : index
    %c0_20 = arith.constant 0 : index
    %c0_21 = arith.constant 0 : index
    %17 = vector.load %arg7[%c0_19, %c0_20, %c0_21] : memref<2x10x8xf32, #tpu.memory_space<vmem>>, vector<2x8x8xf32>
    %c0_22 = arith.constant 0 : index
    %c1_23 = arith.constant 1 : index
    %c0_24 = arith.constant 0 : index
    %18 = vector.load %arg7[%c0_22, %c1_23, %c0_24] : memref<2x10x8xf32, #tpu.memory_space<vmem>>, vector<2x8x8xf32>
    %c0_25 = arith.constant 0 : index
    %c2_26 = arith.constant 2 : index
    %c0_27 = arith.constant 0 : index
    %19 = vector.load %arg7[%c0_25, %c2_26, %c0_27] : memref<2x10x8xf32, #tpu.memory_space<vmem>>, vector<2x8x8xf32>
    %20 = tpu.concatenate %17, %18, %19 in 2 : vector<2x8x8xf32>, vector<2x8x8xf32>, vector<2x8x8xf32> -> vector<2x8x24xf32>
    %c0_28 = arith.constant 0 : index
    %c0_29 = arith.constant 0 : index
    %21 = vector.load %arg2[%c0_28, %c0_29] : memref<24x16xf32, #tpu.memory_space<vmem>>, vector<24x16xf32>
    "tpu.trace_start"() <{level = 10 : i32, message = "blf,fo->blo"}> : () -> ()
    %cst_30 = arith.constant dense<0.000000e+00> : vector<2x8x16xf32>
    %22 = tpu.matmul %20, %21, %cst_30 {dimension_numbers = #tpu.dot_dimension_numbers<[2], [0], [0, 1], [1], [0, 0, 0, 1, 1, 1], [], []>} : vector<2x8x24xf32>, vector<24x16xf32>, vector<2x8x16xf32> -> vector<2x8x16xf32>
    "tpu.trace_stop"() : () -> ()
    %c1_31 = arith.constant 1 : index
    %c0_32 = arith.constant 0 : index
    %23 = vector.load %arg5[%c1_31, %c0_32] : memref<4x128xf32, #tpu.memory_space<vmem>>, vector<1x16xf32>
    %24 = vector.shape_cast %23 : vector<1x16xf32> to vector<1x1x16xf32>
    %25 = vector.broadcast %24 : vector<1x1x16xf32> to vector<2x8x16xf32>
    %26 = arith.addf %22, %25 : vector<2x8x16xf32>
    %cst_33 = arith.constant 0.000000e+00 : f32
    %27 = vector.broadcast %cst_33 : f32 to vector<2x8x16xf32>
    %28 = arith.maximumf %26, %27 : vector<2x8x16xf32>
    %29 = vector.shape_cast %28 : vector<2x8x16xf32> to vector<2x4x2x16xf32>
    %cst_34 = arith.constant dense<0xFF800000> : vector<2x4x16xf32>
    %30 = vector.multi_reduction <maximumf>, %29, %cst_34 [2] : vector<2x4x2x16xf32> to vector<2x4x16xf32>
    %cst_35 = arith.constant 0.000000e+00 : f32
    %31 = vector.broadcast %cst_35 : f32 to vector<2x6x16xf32>
    %c0_36 = arith.constant 0 : index
    %c0_37 = arith.constant 0 : index
    %c0_38 = arith.constant 0 : index
    %32 = vector.load %arg8[%c0_36, %c0_37, %c0_38] : memref<2x6x16xf32, #tpu.memory_space<vmem>>, vector<2x6x16xf32>
    tpu.vector_store %arg8[%c0_36, %c0_37, %c0_38], %31 {strides = array<i32>} : memref<2x6x16xf32, #tpu.memory_space<vmem>>, vector<2x6x16xf32>,
    %c0_39 = arith.constant 0 : index
    %c1_40 = arith.constant 1 : index
    %c0_41 = arith.constant 0 : index
    %33 = vector.load %arg8[%c0_39, %c1_40, %c0_41] : memref<2x6x16xf32, #tpu.memory_space<vmem>>, vector<2x4x16xf32>
    tpu.vector_store %arg8[%c0_39, %c1_40, %c0_41], %30 {strides = array<i32>} : memref<2x6x16xf32, #tpu.memory_space<vmem>>, vector<2x4x16xf32>,
    %c0_42 = arith.constant 0 : index
    %c0_43 = arith.constant 0 : index
    %c0_44 = arith.constant 0 : index
    %34 = vector.load %arg8[%c0_42, %c0_43, %c0_44] : memref<2x6x16xf32, #tpu.memory_space<vmem>>, vector<2x4x16xf32>
    %c0_45 = arith.constant 0 : index
    %c1_46 = arith.constant 1 : index
    %c0_47 = arith.constant 0 : index
    %35 = vector.load %arg8[%c0_45, %c1_46, %c0_47] : memref<2x6x16xf32, #tpu.memory_space<vmem>>, vector<2x4x16xf32>
    %c0_48 = arith.constant 0 : index
    %c2_49 = arith.constant 2 : index
    %c0_50 = arith.constant 0 : index
    %36 = vector.load %arg8[%c0_48, %c2_49, %c0_50] : memref<2x6x16xf32, #tpu.memory_space<vmem>>, vector<2x4x16xf32>
    %37 = tpu.concatenate %34, %35, %36 in 2 : vector<2x4x16xf32>, vector<2x4x16xf32>, vector<2x4x16xf32> -> vector<2x4x48xf32>
    %c0_51 = arith.constant 0 : index
    %c0_52 = arith.constant 0 : index
    %38 = vector.load %arg3[%c0_51, %c0_52] : memref<48x32xf32, #tpu.memory_space<vmem>>, vector<48x32xf32>
    "tpu.trace_start"() <{level = 10 : i32, message = "blf,fo->blo"}> : () -> ()
    %cst_53 = arith.constant dense<0.000000e+00> : vector<2x4x32xf32>
    %39 = tpu.matmul %37, %38, %cst_53 {dimension_numbers = #tpu.dot_dimension_numbers<[2], [0], [0, 1], [1], [0, 0, 0, 1, 1, 1], [], []>} : vector<2x4x48xf32>, vector<48x32xf32>, vector<2x4x32xf32> -> vector<2x4x32xf32>
    "tpu.trace_stop"() : () -> ()
    %c2_54 = arith.constant 2 : index
    %c0_55 = arith.constant 0 : index
    %40 = vector.load %arg5[%c2_54, %c0_55] : memref<4x128xf32, #tpu.memory_space<vmem>>, vector<1x32xf32>
    %41 = vector.shape_cast %40 : vector<1x32xf32> to vector<1x1x32xf32>
    %42 = vector.broadcast %41 : vector<1x1x32xf32> to vector<2x4x32xf32>
    %43 = arith.addf %39, %42 : vector<2x4x32xf32>
    %cst_56 = arith.constant 0.000000e+00 : f32
    %44 = vector.broadcast %cst_56 : f32 to vector<2x4x32xf32>
    %45 = arith.maximumf %43, %44 : vector<2x4x32xf32>
    %46 = vector.shape_cast %45 : vector<2x4x32xf32> to vector<2x2x2x32xf32>
    %cst_57 = arith.constant dense<0xFF800000> : vector<2x2x32xf32>
    %47 = vector.multi_reduction <maximumf>, %46, %cst_57 [2] : vector<2x2x2x32xf32> to vector<2x2x32xf32>
    %c0_58 = arith.constant 0 : index
    %c0_59 = arith.constant 0 : index
    %48 = vector.load %arg4[%c0_58, %c0_59] : memref<2x32xf32, #tpu.memory_space<vmem>>, vector<2x32xf32>
    %49 = vector.shape_cast %48 : vector<2x32xf32> to vector<1x2x32xf32>
    %50 = vector.broadcast %49 : vector<1x2x32xf32> to vector<2x2x32xf32>
    %51 = arith.mulf %47, %50 : vector<2x2x32xf32>
    %cst_60 = arith.constant dense<0.000000e+00> : vector<2x32xf32>
    %52 = vector.multi_reduction <add>, %51, %cst_60 [1] : vector<2x2x32xf32> to vector<2x32xf32>
    %cst_61 = arith.constant dense<0.000000e+00> : vector<2xf32>
    %53 = vector.multi_reduction <add>, %52, %cst_61 [1] : vector<2x32xf32> to vector<2xf32>
    %54 = vector.shape_cast %53 : vector<2xf32> to vector<2x1xf32>
    %c3 = arith.constant 3 : index
    %c0_62 = arith.constant 0 : index
    %55 = vector.load %arg5[%c3, %c0_62] : memref<4x128xf32, #tpu.memory_space<vmem>>, vector<1x1xf32>
    %56 = vector.broadcast %55 : vector<1x1xf32> to vector<2x1xf32>
    %57 = arith.addf %54, %56 : vector<2x1xf32>
    %c0_63 = arith.constant 0 : index
    %c0_64 = arith.constant 0 : index
    %58 = vector.load %arg6[%c0_63, %c0_64] : memref<2x1xf32, #tpu.memory_space<vmem>>, vector<2x1xf32>
    tpu.vector_store %arg6[%c0_63, %c0_64], %57 {strides = array<i32>} : memref<2x1xf32, #tpu.memory_space<vmem>>, vector<2x1xf32>,
    return
  }
}

</mosaic_0001>

<llo_original>
// kernel: _lambda_.1
$region0: #{_lambda_.1}
  #allocation0 [shape = 'u32[]', space=smem, size = 0x4, offset = 0x4, fixed_abs, tag = 'smem constant byte address 0x4 - core index']
  #allocation1 [shape = 'u32[72,128]{1,0:T(1,128)}', space=vmem, size = 0x9000, scoped, tag = 'internal scratch']
  #allocation2 [shape = 'f32[2,10,8]{2,1,0:T(8,128)}', space=vmem, size = 0x4000, scoped, tag = 'scratch operand']
  #allocation3 [shape = 'f32[2,6,16]{2,1,0:T(8,128)}', space=vmem, size = 0x2000, scoped, tag = 'scratch operand']
  %s0 = inlined_call_operand.vmem [shape: f32[2,18,4], index: 0, kind: input, shape index: {}]
  %s1 = inlined_call_operand.vmem [shape: f32[12,8], index: 1, kind: input, shape index: {}]
  %s2 = inlined_call_operand.vmem [shape: f32[24,16], index: 2, kind: input, shape index: {}]
  %s3 = inlined_call_operand.vmem [shape: f32[48,32], index: 3, kind: input, shape index: {}]
  %s4 = inlined_call_operand.vmem [shape: f32[2,32], index: 4, kind: input, shape index: {}]
  %s5 = inlined_call_operand.vmem [shape: f32[4,128], index: 5, kind: input, shape index: {}]
  %s6 = inlined_call_operand.vmem [shape: f32[2,1], index: 6, kind: output, shape index: {}]
  %s7 = sld [smem:[#allocation0]]
  $region34: #{_lambda_.1} parent=0
    _
  %s9 = ssub.s32 1, %s7
  %s10 = scalar_select 0, %s9, %s7
  // Predicated region
  $region2: #{_lambda_.1} parent=0 // pred_check
    _
  $region3: #{_lambda_.1} parent=0 // pred_check_branch
    %12 = sbr.rel (0) target = $region5
  $region4: #{_lambda_.1} parent=0 // pred_region
    _
  $region5: #{_lambda_.1} parent=0 // pred_fallthru
    _
  // Predicated region
  $region6: #{_lambda_.1} parent=0 // pred_check
    _
  $region7: #{_lambda_.1} parent=0 // pred_check_branch
    %14 = sbr.rel (0) target = $region9
  $region8: #{_lambda_.1} parent=0 // pred_region
    _
  $region9: #{_lambda_.1} parent=0 // pred_fallthru
    _
  // Predicated region
  $region10: #{_lambda_.1} parent=0 // pred_check
    _
  $region11: #{_lambda_.1} parent=0 // pred_check_branch
    %16 = sbr.rel (0) target = $region13
  $region12: #{_lambda_.1} parent=0 // pred_region
    _
  $region13: #{_lambda_.1} parent=0 // pred_fallthru
    _
  // Predicated region
  $region14: #{_lambda_.1} parent=0 // pred_check
    _
  $region15: #{_lambda_.1} parent=0 // pred_check_branch
    %18 = sbr.rel (0) target = $region17
  $region16: #{_lambda_.1} parent=0 // pred_region
    _
  $region17: #{_lambda_.1} parent=0 // pred_fallthru
    _
  // Predicated region
  $region18: #{_lambda_.1} parent=0 // pred_check
    _
  $region19: #{_lambda_.1} parent=0 // pred_check_branch
    %20 = sbr.rel (0) target = $region21
  $region20: #{_lambda_.1} parent=0 // pred_region
    _
  $region21: #{_lambda_.1} parent=0 // pred_fallthru
    _
  // Predicated region
  $region22: #{_lambda_.1} parent=0 // pred_check
    _
  $region23: #{_lambda_.1} parent=0 // pred_check_branch
    %22 = sbr.rel (0) target = $region25
  $region24: #{_lambda_.1} parent=0 // pred_region
    _
  $region25: #{_lambda_.1} parent=0 // pred_fallthru
    _
  %v23 = vld [vmem:[%s0] sm:$0xff]
  %v24 = vld [vmem:[%s0 + $0x8] sm:$0xff]
  %v25 = vld [vmem:[%s0 + $0x18] sm:$0xff]
  %v26 = vld [vmem:[%s0 + $0x20] sm:$0xff]
  %v27 = vld [vmem:[%s0 + $0x1] sm:$0xff]
  %v28 = vld [vmem:[%s0 + $0x9] sm:$0xff]
  %v29 = vld [vmem:[%s0 + $0x19] sm:$0xff]
  %v30 = vld [vmem:[%s0 + $0x21] sm:$0xff]
  %v31 = vld [vmem:[%s0 + $0x2] sm:$0xff]
  %v32 = vld [vmem:[%s0 + $0xa] sm:$0xff]
  %v33 = vld [vmem:[%s0 + $0x1a] sm:$0xff]
  %v34 = vld [vmem:[%s0 + $0x22] sm:$0xff]
  %39 = vrot.lane.b32.xlu0 %v27, 4
  %v40 = vpop.permute.xlu0 %39
  %41 = vrot.lane.b32.xlu0 %v28, 4
  %v42 = vpop.permute.xlu0 %41
  %43 = vrot.lane.b32.xlu0 %v29, 4
  %v44 = vpop.permute.xlu0 %43
  %45 = vrot.lane.b32.xlu0 %v30, 4
  %v46 = vpop.permute.xlu0 %45
  %55 = vrot.lane.b32.xlu0 %v31, 8
  %v56 = vpop.permute.xlu0 %55
  %57 = vrot.lane.b32.xlu0 %v32, 8
  %v58 = vpop.permute.xlu0 %57
  %59 = vrot.lane.b32.xlu0 %v33, 8
  %v60 = vpop.permute.xlu0 %59
  %61 = vrot.lane.b32.xlu0 %v34, 8
  %v62 = vpop.permute.xlu0 %61
  %vm67 = vcmask 31744
  %v68 = vsel %vm67, %v23, %v40
  %v69 = vsel %vm67, %v24, %v42
  %v70 = vsel %vm67, %v25, %v44
  %v71 = vsel %vm67, %v26, %v46
  %vm72 = vcmask 64512
  %v73 = vsel %vm72, %v68, %v56
  %v74 = vsel %vm72, %v69, %v58
  %v75 = vsel %vm72, %v70, %v60
  %v76 = vsel %vm72, %v71, %v62
  %v77 = vld [vmem:[%s1] sm:$0xff]
  %v78 = vld [vmem:[%s1 + $0x8] sm:$0xf]
  %v79 = vld [vmem:[%s5] sm:$0x1]
  %v80 = vperm.slane %v79, 0
  %vm81 = vcmask 97280
  %v83 = vsel %vm81, %v73, 0
  %v86 = vsel %vm81, %v74, 0
  %v89 = vsel %vm81, %v75, 0
  %v92 = vsel %vm81, %v76, 0
  %vm94 = vcmask 1043456
  %v96 = vsel %vm94, %v78, 0
  %98 = vmatpush.msra.mxu0 0.0
  %99 = vmatpush.msra.mxu0 0.0
  %100 = vmatpush.msra.mxu0 0.0
  %101 = vmatpush.msra.mxu0 0.0
  %102 = vmatpush.msra.mxu0 0.0
  %103 = vmatpush.msra.mxu0 0.0
  %104 = vmatpush.msra.mxu0 0.0
  %105 = vmatpush.msra.mxu0 0.0
  %106 = vmatpush.msra.mxu0 0.0
  %107 = vmatpush.msra.mxu0 0.0
  %108 = vmatpush.msra.mxu0 0.0
  %109 = vmatpush.msra.mxu0 0.0
  %110 = vmatpush.msra.mxu0 0.0
  %111 = vmatpush.msra.mxu0 0.0
  %112 = vmatpush.msra.mxu0 %v96
  %113 = vmatpush.msra.mxu0 %v77
  %114 = vmatmul.f32.gmra.mxu0 %v83
  %v115 = vpop.f32.mrf.mxu0
  %v116 = vadd.f32 %v80, %v115
  %117 = vmatmul.f32.gmra.mxu0 %v86
  %v118 = vpop.f32.mrf.mxu0
  %v119 = vadd.f32 %v80, %v118
  %120 = vmatmul.f32.gmra.mxu0 %v89
  %v121 = vpop.f32.mrf.mxu0
  %v122 = vadd.f32 %v80, %v121
  %123 = vmatmul.f32.gmra.mxu0 %v92
  %v124 = vpop.f32.mrf.mxu0
  %v125 = vadd.f32 %v80, %v124
  %126 = vdwg.mxu0
  %v127 = vmax.f32 %v116, 0.0
  %v128 = vmax.f32 %v119, 0.0
  %v129 = vmax.f32 %v122, 0.0
  %v130 = vmax.f32 %v125, 0.0
  %v135 = vrot.slane %v127, 2
  %v136 = vrot.slane %v127, 4
  %v137 = vrot.slane %v127, 6
  %v138 = vrot.slane %v128, 2
  %v139 = vrot.slane %v128, 4
  %v140 = vrot.slane %v128, 6
  %v141 = vrot.slane %v129, 2
  %v142 = vrot.slane %v129, 4
  %v143 = vrot.slane %v129, 6
  %v144 = vrot.slane %v130, 2
  %v145 = vrot.slane %v130, 4
  %v146 = vrot.slane %v130, 6
  %vm159 = vcmask 58368
  %v160 = vsel %vm159, %v127, -inf
  %v161 = vrot.slane %v160, 4
  %v162 = vmax.f32 %v160, %v161
  %v163 = vrot.slane %v162, 2
  %v164 = vmax.f32 %v162, %v163
  %v165 = vrot.slane %v164, 1
  %v166 = vmax.f32 %v164, %v165
  %v167 = vsel %vm159, %v135, -inf
  %v168 = vrot.slane %v167, 4
  %v169 = vmax.f32 %v167, %v168
  %v170 = vrot.slane %v169, 2
  %v171 = vmax.f32 %v169, %v170
  %v172 = vrot.slane %v171, 1
  %v173 = vmax.f32 %v171, %v172
  %v174 = vsel %vm159, %v136, -inf
  %v175 = vrot.slane %v174, 4
  %v176 = vmax.f32 %v174, %v175
  %v177 = vrot.slane %v176, 2
  %v178 = vmax.f32 %v176, %v177
  %v179 = vrot.slane %v178, 1
  %v180 = vmax.f32 %v178, %v179
  %v181 = vsel %vm159, %v137, -inf
  %v182 = vrot.slane %v181, 4
  %v183 = vmax.f32 %v181, %v182
  %v184 = vrot.slane %v183, 2
  %v185 = vmax.f32 %v183, %v184
  %v186 = vrot.slane %v185, 1
  %v187 = vmax.f32 %v185, %v186
  %v188 = vsel %vm159, %v128, -inf
  %v189 = vrot.slane %v188, 4
  %v190 = vmax.f32 %v188, %v189
  %v191 = vrot.slane %v190, 2
  %v192 = vmax.f32 %v190, %v191
  %v193 = vrot.slane %v192, 1
  %v194 = vmax.f32 %v192, %v193
  %v195 = vsel %vm159, %v138, -inf
  %v196 = vrot.slane %v195, 4
  %v197 = vmax.f32 %v195, %v196
  %v198 = vrot.slane %v197, 2
  %v199 = vmax.f32 %v197, %v198
  %v200 = vrot.slane %v199, 1
  %v201 = vmax.f32 %v199, %v200
  %v202 = vsel %vm159, %v139, -inf
  %v203 = vrot.slane %v202, 4
  %v204 = vmax.f32 %v202, %v203
  %v205 = vrot.slane %v204, 2
  %v206 = vmax.f32 %v204, %v205
  %v207 = vrot.slane %v206, 1
  %v208 = vmax.f32 %v206, %v207
  %v209 = vsel %vm159, %v140, -inf
  %v210 = vrot.slane %v209, 4
  %v211 = vmax.f32 %v209, %v210
  %v212 = vrot.slane %v211, 2
  %v213 = vmax.f32 %v211, %v212
  %v214 = vrot.slane %v213, 1
  %v215 = vmax.f32 %v213, %v214
  %v216 = vsel %vm159, %v129, -inf
  %v217 = vrot.slane %v216, 4
  %v218 = vmax.f32 %v216, %v217
  %v219 = vrot.slane %v218, 2
  %v220 = vmax.f32 %v218, %v219
  %v221 = vrot.slane %v220, 1
  %v222 = vmax.f32 %v220, %v221
  %v223 = vsel %vm159, %v141, -inf
  %v224 = vrot.slane %v223, 4
  %v225 = vmax.f32 %v223, %v224
  %v226 = vrot.slane %v225, 2
  %v227 = vmax.f32 %v225, %v226
  %v228 = vrot.slane %v227, 1
  %v229 = vmax.f32 %v227, %v228
  %v230 = vsel %vm159, %v142, -inf
  %v231 = vrot.slane %v230, 4
  %v232 = vmax.f32 %v230, %v231
  %v233 = vrot.slane %v232, 2
  %v234 = vmax.f32 %v232, %v233
  %v235 = vrot.slane %v234, 1
  %v236 = vmax.f32 %v234, %v235
  %v237 = vsel %vm159, %v143, -inf
  %v238 = vrot.slane %v237, 4
  %v239 = vmax.f32 %v237, %v238
  %v240 = vrot.slane %v239, 2
  %v241 = vmax.f32 %v239, %v240
  %v242 = vrot.slane %v241, 1
  %v243 = vmax.f32 %v241, %v242
  %v244 = vsel %vm159, %v130, -inf
  %v245 = vrot.slane %v244, 4
  %v246 = vmax.f32 %v244, %v245
  %v247 = vrot.slane %v246, 2
  %v248 = vmax.f32 %v246, %v247
  %v249 = vrot.slane %v248, 1
  %v250 = vmax.f32 %v248, %v249
  %v251 = vsel %vm159, %v144, -inf
  %v252 = vrot.slane %v251, 4
  %v253 = vmax.f32 %v251, %v252
  %v254 = vrot.slane %v253, 2
  %v255 = vmax.f32 %v253, %v254
  %v256 = vrot.slane %v255, 1
  %v257 = vmax.f32 %v255, %v256
  %v258 = vsel %vm159, %v145, -inf
  %v259 = vrot.slane %v258, 4
  %v260 = vmax.f32 %v258, %v259
  %v261 = vrot.slane %v260, 2
  %v262 = vmax.f32 %v260, %v261
  %v263 = vrot.slane %v262, 1
  %v264 = vmax.f32 %v262, %v263
  %v265 = vsel %vm159, %v146, -inf
  %v266 = vrot.slane %v265, 4
  %v267 = vmax.f32 %v265, %v266
  %v268 = vrot.slane %v267, 2
  %v269 = vmax.f32 %v267, %v268
  %v270 = vrot.slane %v269, 1
  %v271 = vmax.f32 %v269, %v270
  %272 = vst.msk [vmem:[#allocation2] sm:$0xff] %vm72, 0.0
  %273 = vst.msk [vmem:[#allocation2 + $0x8] sm:$0x3] %vm159, 0.0
  %274 = vst.msk [vmem:[#allocation2 + $0x10] sm:$0xff] %vm72, 0.0
  %275 = vst.msk [vmem:[#allocation2 + $0x18] sm:$0x3] %vm159, 0.0
  %vm292 = vcmask 1041409
  %v293 = vsel %vm292, %v173, %v166
  %vm294 = vcmask 1042434
  %v295 = vsel %vm294, %v180, %v293
  %vm296 = vcmask 1043459
  %v297 = vsel %vm296, %v187, %v295
  %vm298 = vcmask 1044484
  %v299 = vsel %vm298, %v194, %v297
  %vm300 = vcmask 1045509
  %v301 = vsel %vm300, %v201, %v299
  %vm302 = vcmask 1046534
  %v303 = vsel %vm302, %v208, %v301
  %vm304 = vcmask 1047559
  %v305 = vsel %vm304, %v215, %v303
  %v306 = vsel %vm292, %v229, %v222
  %v307 = vsel %vm294, %v236, %v306
  %v308 = vsel %vm296, %v243, %v307
  %v309 = vsel %vm298, %v250, %v308
  %v310 = vsel %vm300, %v257, %v309
  %v311 = vsel %vm302, %v264, %v310
  %v312 = vsel %vm304, %v271, %v311
  %315 = vst.msk [vmem:[#allocation2 + $0x1] sm:$0xff] %vm72, %v305
  %316 = vst.msk [vmem:[#allocation2 + $0x11] sm:$0xff] %vm72, %v312
  %v317 = vld [vmem:[#allocation2] sm:$0xff]
  %v318 = vld [vmem:[#allocation2 + $0x10] sm:$0xff]
  %v319 = vld [vmem:[#allocation2 + $0x1] sm:$0xff]
  %v320 = vld [vmem:[#allocation2 + $0x11] sm:$0xff]
  %v321 = vld [vmem:[#allocation2 + $0x2] sm:$0xff]
  %v322 = vld [vmem:[#allocation2 + $0x12] sm:$0xff]
  %325 = vrot.lane.b32.xlu0 %v319, 8
  %v326 = vpop.permute.xlu0 %325
  %327 = vrot.lane.b32.xlu0 %v320, 8
  %v328 = vpop.permute.xlu0 %327
  %333 = vrot.lane.b32.xlu0 %v321, 16
  %v334 = vpop.permute.xlu0 %333
  %335 = vrot.lane.b32.xlu0 %v322, 16
  %v336 = vpop.permute.xlu0 %335
  %v339 = vsel %vm72, %v317, %v326
  %v340 = vsel %vm72, %v318, %v328
  %vm341 = vcmask 130048
  %v342 = vsel %vm341, %v339, %v334
  %v343 = vsel %vm341, %v340, %v336
  %v344 = vld [vmem:[%s2] sm:$0xff]
  %v345 = vld [vmem:[%s2 + $0x8] sm:$0xff]
  %v346 = vld [vmem:[%s2 + $0x10] sm:$0xff]
  %v347 = vld [vmem:[%s5 + $0x1] sm:$0x1]
  %v348 = vperm.slane %v347, 0
  %vm349 = vcmask 195584
  %v351 = vsel %vm349, %v342, 0
  %v354 = vsel %vm349, %v343, 0
  %356 = vmatpush.msra.mxu0 0.0
  %357 = vmatpush.msra.mxu0 0.0
  %358 = vmatpush.msra.mxu0 0.0
  %359 = vmatpush.msra.mxu0 0.0
  %360 = vmatpush.msra.mxu0 0.0
  %361 = vmatpush.msra.mxu0 0.0
  %362 = vmatpush.msra.mxu0 0.0
  %363 = vmatpush.msra.mxu0 0.0
  %364 = vmatpush.msra.mxu0 0.0
  %365 = vmatpush.msra.mxu0 0.0
  %366 = vmatpush.msra.mxu0 0.0
  %367 = vmatpush.msra.mxu0 0.0
  %368 = vmatpush.msra.mxu0 0.0
  %369 = vmatpush.msra.mxu0 %v346
  %370 = vmatpush.msra.mxu0 %v345
  %371 = vmatpush.msra.mxu0 %v344
  %372 = vmatmul.f32.gmra.mxu0 %v351
  %v373 = vpop.f32.mrf.mxu0
  %v374 = vadd.f32 %v348, %v373
  %375 = vmatmul.f32.gmra.mxu0 %v354
  %v376 = vpop.f32.mrf.mxu0
  %v377 = vadd.f32 %v348, %v376
  %378 = vdwg.mxu0
  %v379 = vmax.f32 %v374, 0.0
  %v380 = vmax.f32 %v377, 0.0
  %v383 = vrot.slane %v379, 2
  %v384 = vrot.slane %v379, 4
  %v385 = vrot.slane %v379, 6
  %v386 = vrot.slane %v380, 2
  %v387 = vrot.slane %v380, 4
  %v388 = vrot.slane %v380, 6
  %vm395 = vcmask 123904
  %v396 = vsel %vm395, %v379, -inf
  %v397 = vrot.slane %v396, 4
  %v398 = vmax.f32 %v396, %v397
  %v399 = vrot.slane %v398, 2
  %v400 = vmax.f32 %v398, %v399
  %v401 = vrot.slane %v400, 1
  %v402 = vmax.f32 %v400, %v401
  %v403 = vsel %vm395, %v383, -inf
  %v404 = vrot.slane %v403, 4
  %v405 = vmax.f32 %v403, %v404
  %v406 = vrot.slane %v405, 2
  %v407 = vmax.f32 %v405, %v406
  %v408 = vrot.slane %v407, 1
  %v409 = vmax.f32 %v407, %v408
  %v410 = vsel %vm395, %v384, -inf
  %v411 = vrot.slane %v410, 4
  %v412 = vmax.f32 %v410, %v411
  %v413 = vrot.slane %v412, 2
  %v414 = vmax.f32 %v412, %v413
  %v415 = vrot.slane %v414, 1
  %v416 = vmax.f32 %v414, %v415
  %v417 = vsel %vm395, %v385, -inf
  %v418 = vrot.slane %v417, 4
  %v419 = vmax.f32 %v417, %v418
  %v420 = vrot.slane %v419, 2
  %v421 = vmax.f32 %v419, %v420
  %v422 = vrot.slane %v421, 1
  %v423 = vmax.f32 %v421, %v422
  %v424 = vsel %vm395, %v380, -inf
  %v425 = vrot.slane %v424, 4
  %v426 = vmax.f32 %v424, %v425
  %v427 = vrot.slane %v426, 2
  %v428 = vmax.f32 %v426, %v427
  %v429 = vrot.slane %v428, 1
  %v430 = vmax.f32 %v428, %v429
  %v431 = vsel %vm395, %v386, -inf
  %v432 = vrot.slane %v431, 4
  %v433 = vmax.f32 %v431, %v432
  %v434 = vrot.slane %v433, 2
  %v435 = vmax.f32 %v433, %v434
  %v436 = vrot.slane %v435, 1
  %v437 = vmax.f32 %v435, %v436
  %v438 = vsel %vm395, %v387, -inf
  %v439 = vrot.slane %v438, 4
  %v440 = vmax.f32 %v438, %v439
  %v441 = vrot.slane %v440, 2
  %v442 = vmax.f32 %v440, %v441
  %v443 = vrot.slane %v442, 1
  %v444 = vmax.f32 %v442, %v443
  %v445 = vsel %vm395, %v388, -inf
  %v446 = vrot.slane %v445, 4
  %v447 = vmax.f32 %v445, %v446
  %v448 = vrot.slane %v447, 2
  %v449 = vmax.f32 %v447, %v448
  %v450 = vrot.slane %v449, 1
  %v451 = vmax.f32 %v449, %v450
  %vm452 = vcmask 128000
  %453 = vst.msk [vmem:[#allocation3] sm:$0x3f] %vm452, 0.0
  %454 = vst.msk [vmem:[#allocation3 + $0x8] sm:$0x3f] %vm452, 0.0
  %v463 = vsel %vm292, %v409, %v402
  %v464 = vsel %vm294, %v416, %v463
  %v465 = vsel %vm296, %v423, %v464
  %v466 = vsel %vm292, %v437, %v430
  %v467 = vsel %vm294, %v444, %v466
  %v468 = vsel %vm296, %v451, %v467
  %vm471 = vcmask 125952
  %472 = vst.msk [vmem:[#allocation3 + $0x1] sm:$0xf] %vm471, %v465
  %473 = vst.msk [vmem:[#allocation3 + $0x9] sm:$0xf] %vm471, %v468
  %v474 = vld [vmem:[#allocation3] sm:$0xf]
  %v475 = vld [vmem:[#allocation3 + $0x8] sm:$0xf]
  %v476 = vld [vmem:[#allocation3 + $0x1] sm:$0xf]
  %v477 = vld [vmem:[#allocation3 + $0x9] sm:$0xf]
  %v478 = vld [vmem:[#allocation3 + $0x2] sm:$0xf]
  %v479 = vld [vmem:[#allocation3 + $0xa] sm:$0xf]
  %482 = vrot.lane.b32.xlu0 %v476, 16
  %v483 = vpop.permute.xlu0 %482
  %484 = vrot.lane.b32.xlu0 %v477, 16
  %v485 = vpop.permute.xlu0 %484
  %490 = vrot.lane.b32.xlu0 %v478, 32
  %v491 = vpop.permute.xlu0 %490
  %492 = vrot.lane.b32.xlu0 %v479, 32
  %v493 = vpop.permute.xlu0 %492
  %v496 = vsel %vm341, %v474, %v483
  %v497 = vsel %vm341, %v475, %v485
  %vm498 = vcmask 261120
  %v499 = vsel %vm498, %v496, %v491
  %v500 = vsel %vm498, %v497, %v493
  %v501 = vld [vmem:[%s3] sm:$0xff]
  %v502 = vld [vmem:[%s3 + $0x8] sm:$0xff]
  %v503 = vld [vmem:[%s3 + $0x10] sm:$0xff]
  %v504 = vld [vmem:[%s3 + $0x18] sm:$0xff]
  %v505 = vld [vmem:[%s3 + $0x20] sm:$0xff]
  %v506 = vld [vmem:[%s3 + $0x28] sm:$0xff]
  %v507 = vld [vmem:[%s5 + $0x2] sm:$0x1]
  %v508 = vperm.slane %v507, 0
  %511 = vst [vmem:[#allocation1] ss:$2 sm:$0xff] %v499
  %s512 = scalar_lea.vmem [#allocation1], 1
  %513 = vst [vmem:[%s512] ss:$2 sm:$0xff] %v500
  %v514 = vld.sshfl [vmem:[#allocation1] sm:$0xff pattern:$0x75316420]
  %516 = vst [vmem:[#allocation1] ss:$2 sm:$0xff] %v508
  %s517 = scalar_lea.vmem [#allocation1], 1
  %518 = vst [vmem:[%s517] ss:$2 sm:$0xff] %v508
  %v519 = vld.sshfl [vmem:[#allocation1] sm:$0xff pattern:$0x75316420]
  %vm521 = vcmask 392192
  %v522 = vsel %vm521, %v514, 0
  %524 = vmatpush.msra.mxu0 0.0
  %525 = vmatpush.msra.mxu0 0.0
  %526 = vmatpush.msra.mxu0 0.0
  %527 = vmatpush.msra.mxu0 0.0
  %528 = vmatpush.msra.mxu0 0.0
  %529 = vmatpush.msra.mxu0 0.0
  %530 = vmatpush.msra.mxu0 0.0
  %531 = vmatpush.msra.mxu0 0.0
  %532 = vmatpush.msra.mxu0 0.0
  %533 = vmatpush.msra.mxu0 0.0
  %534 = vmatpush.msra.mxu0 %v506
  %535 = vmatpush.msra.mxu0 %v505
  %536 = vmatpush.msra.mxu0 %v504
  %537 = vmatpush.msra.mxu0 %v503
  %538 = vmatpush.msra.mxu0 %v502
  %539 = vmatpush.msra.mxu0 %v501
  %540 = vmatmul.f32.gmra.mxu0 %v522
  %v541 = vpop.f32.mrf.mxu0
  %v542 = vadd.f32 %v519, %v541
  %543 = vdwg.mxu0
  %v545 = vrot.slane %v542, 4
  %v547 = vmax.f32 %v542, 0.0
  %v548 = vmax.f32 %v545, 0.0
  %v551 = vrot.slane %v547, 2
  %v552 = vrot.slane %v548, 2
  %vm553 = vcmask 1041408
  %v554 = vsel %vm553, %v547, %v551
  %vm555 = vcmask 1043458
  %v556 = vsel %vm555, %v547, %v551
  %v557 = vrot.slane %v556, 2
  %v558 = vsel %vm553, %v548, %v552
  %v559 = vsel %vm555, %v548, %v552
  %v560 = vrot.slane %v559, 2
  %vm565 = vcmask 254976
  %v566 = vsel %vm565, %v554, -inf
  %v567 = vrot.slane %v566, 4
  %v568 = vmax.f32 %v566, %v567
  %v569 = vrot.slane %v568, 2
  %v570 = vmax.f32 %v568, %v569
  %v571 = vrot.slane %v570, 1
  %v572 = vmax.f32 %v570, %v571
  %v573 = vsel %vm565, %v557, -inf
  %v574 = vrot.slane %v573, 4
  %v575 = vmax.f32 %v573, %v574
  %v576 = vrot.slane %v575, 2
  %v577 = vmax.f32 %v575, %v576
  %v578 = vrot.slane %v577, 1
  %v579 = vmax.f32 %v577, %v578
  %v580 = vsel %vm565, %v558, -inf
  %v581 = vrot.slane %v580, 4
  %v582 = vmax.f32 %v580, %v581
  %v583 = vrot.slane %v582, 2
  %v584 = vmax.f32 %v582, %v583
  %v585 = vrot.slane %v584, 1
  %v586 = vmax.f32 %v584, %v585
  %v587 = vsel %vm565, %v560, -inf
  %v588 = vrot.slane %v587, 4
  %v589 = vmax.f32 %v587, %v588
  %v590 = vrot.slane %v589, 2
  %v591 = vmax.f32 %v589, %v590
  %v592 = vrot.slane %v591, 1
  %v593 = vmax.f32 %v591, %v592
  %v594 = vld [vmem:[%s4] sm:$0x3]
  %v596 = vrot.slane %v594, 1
  %v599 = vmul.f32 %v572, %v594
  %v600 = vmul.f32 %v579, %v596
  %v601 = vmul.f32 %v586, %v594
  %v602 = vmul.f32 %v593, %v596
  %v607 = vrot.slane %v600, 7
  %v608 = vsel %vm292, %v607, %v599
  %v609 = vrot.slane %v602, 7
  %v610 = vsel %vm292, %v609, %v601
  %v613 = vsel %vm565, %v608, 0.0
  %v614 = vrot.slane %v613, 4
  %v615 = vadd.f32 %v613, %v614
  %v616 = vrot.slane %v615, 2
  %v617 = vadd.f32 %v615, %v616
  %v618 = vrot.slane %v617, 1
  %v619 = vadd.f32 %v617, %v618
  %v620 = vsel %vm565, %v610, 0.0
  %v621 = vrot.slane %v620, 4
  %v622 = vadd.f32 %v620, %v621
  %v623 = vrot.slane %v622, 2
  %v624 = vadd.f32 %v622, %v623
  %v625 = vrot.slane %v624, 1
  %v626 = vadd.f32 %v624, %v625
  %v629 = vrot.slane %v626, 7
  %v630 = vsel %vm292, %v629, %v619
  %v632 = vsel %vm565, %v630, 0.0
  %633 = vadd.xlane.f32.xlu0 %v632
  %v634 = vpop.xlane.xlu0 %633
  %v635 = vld [vmem:[%s5 + $0x3] sm:$0x1]
  %v636 = vperm.slane %v635, 0
  %v637 = vadd.f32 %v634, %v636
  %vm638 = vcmask 1024
  %639 = vst.msk [vmem:[%s6] sm:$0x3] %vm638, %v637
  // Predicated region
  $region26: #{_lambda_.1} parent=0 // pred_check
    _
  $region27: #{_lambda_.1} parent=0 // pred_check_branch
    %641 = sbr.rel (0) target = $region29
  $region28: #{_lambda_.1} parent=0 // pred_region
    _
  $region29: #{_lambda_.1} parent=0 // pred_fallthru
    _
  // Predicated region
  $region30: #{_lambda_.1} parent=0 // pred_check
    _
  $region31: #{_lambda_.1} parent=0 // pred_check_branch
    %643 = sbr.rel (0) target = $region33
  $region32: #{_lambda_.1} parent=0 // pred_region
    _
  $region33: #{_lambda_.1} parent=0 // pred_fallthru
    _

</llo_original>
